<compile_context>
chip_gen: v6e
topology: v6e:2x2x1
jax: 0.10.0
libtpu: 0.0.40
codegen_flags: <defaults>
</compile_context>

<pallas_src>
import functools

import jax
import jax.numpy as jnp
from jax.experimental import pallas as pl
from jax.experimental.pallas import tpu as pltpu


_LANE = 128
_SUBLANE = 8
# (8192, 128) f32 block = 4 MiB.  2 inputs x 2 pipeline buffers x 4 MiB
# + (8,128) accumulator ~= 16 MiB VMEM; vmem_limit_bytes is raised to 48 MiB
# so this also fits v5e's (16 MiB default) scoped budget.
_MAX_BLOCK_ROWS = 8192


def _num_tensorcores_per_chip():
    """Best-effort detection: v7x has 2 TensorCores per chip, v5e/v6e have 1."""
    try:
        kind = jax.devices()[0].device_kind.lower()
    except Exception:  # pragma: no cover - defensive
        return 1
    if "v7" in kind or "7x" in kind:
        return 2
    return 1


# ----------------------------- Pallas kernel --------------------------------

def _sq_err_kernel(x_ref, y_ref, o_ref, acc_ref, *,
                   rows_total, row_tile, steps_total, steps_per_part,
                   mask_last_block, mask_ownership):
    """Accumulate per-(sublane,lane) partial sums of (x - y)^2 over row-blocks.

    Grid is (partitions, steps_per_partition).  Partition p processes the
    row-block range [p * (steps_total - steps_per_part), ... + steps_per_part);
    overlap blocks (odd splits) are skipped by the ownership pl.when, and the
    ragged last row-block masks its out-of-bounds rows.
    """
    p = pl.program_id(0)
    s = pl.program_id(1)
    g = p * (steps_total - steps_per_part) + s   # global row-block index

    @pl.when(s == 0)
    def _():
        acc_ref[...] = jnp.zeros_like(acc_ref)

    def _accumulate():
        d = x_ref[...].astype(jnp.float32) - y_ref[...].astype(jnp.float32)
        sq = d * d

        def _add(vals):
            # Layout-preserving reshape; axis-0 sum is plain vreg adds (VPU).
            acc_ref[...] += jnp.sum(vals.reshape(-1, _SUBLANE, _LANE), axis=0)

        if mask_last_block:
            @pl.when(g == steps_total - 1)
            def _():
                row_ids = (g * row_tile
                           + jax.lax.broadcasted_iota(jnp.int32, sq.shape, 0))
                _add(jnp.where(row_ids < rows_total, sq, 0.0))

            @pl.when(g != steps_total - 1)
            def _():
                _add(sq)
        else:
            _add(sq)

    if mask_ownership:
        # Scalar gate: overlap blocks (shared by both partitions when the split
        # is odd) are computed only by partition 0.
        @pl.when(g >= p * steps_per_part)
        def _():
            _accumulate()
    else:
        _accumulate()

    @pl.when(s == pl.num_programs(1) - 1)
    def _():
        o_ref[...] = acc_ref[...]


def _squared_error_sum(pred, target):
    """sum((pred - target)^2) over all elements, via a Pallas TPU kernel."""
    assert pred.shape == target.shape
    n = int(pred.size)

    x = pred.reshape(-1)
    y = target.reshape(-1)

    block_elems = _SUBLANE * _LANE            # 1024
    main = (n // block_elems) * block_elems   # multiple of 8*128
    rem = n - main

    total = jnp.zeros((), jnp.float32)
    if rem:
        # Tiny (< 1024 element) ragged tail: reduce with a separate jnp call
        # instead of jnp.pad-ing (and copying) the whole array.
        xt = jax.lax.slice(x, (main,), (n,)).astype(jnp.float32)
        yt = jax.lax.slice(y, (main,), (n,)).astype(jnp.float32)
        total = total + jnp.sum((xt - yt) ** 2)
        if main == 0:
            return total
        # TODO(synk): this prefix slice may materialize a copy for ragged
        # inputs (n % 1024 != 0); an in-kernel lane mask would avoid it.
        x = jax.lax.slice(x, (0,), (main,))
        y = jax.lax.slice(y, (0,), (main,))

    rows = main // _LANE                      # multiple of 8
    x2 = x.reshape(rows, _LANE)
    y2 = y.reshape(rows, _LANE)

    row_tile = min(_MAX_BLOCK_ROWS, rows)
    steps_total = (rows + row_tile - 1) // row_tile

    cores = _num_tensorcores_per_chip()
    parts = 2 if (cores >= 2 and steps_total >= 2) else 1
    spp = (steps_total + parts - 1) // parts

    mask_last_block = steps_total * row_tile != rows
    mask_ownership = parts > 1 and parts * spp != steps_total

    def in_map(p, s):
        # Partition p covers `spp` consecutive row-blocks starting at its
        # offset; always an in-range block index (overlap is skipped in-kernel).
        return (p * (steps_total - spp) + s, 0)

    kernel = functools.partial(
        _sq_err_kernel,
        rows_total=rows, row_tile=row_tile, steps_total=steps_total,
        steps_per_part=spp, mask_last_block=mask_last_block,
        mask_ownership=mask_ownership)

    bytes_in = 2 * rows * _LANE * x2.dtype.itemsize
    out = pl.pallas_call(
        kernel,
        out_shape=jax.ShapeDtypeStruct((parts * _SUBLANE, _LANE), jnp.float32),
        grid_spec=pltpu.PrefetchScalarGridSpec(
            num_scalar_prefetch=0,
            grid=(parts, spp),
            in_specs=[
                pl.BlockSpec((row_tile, _LANE), in_map),
                pl.BlockSpec((row_tile, _LANE), in_map),
            ],
            out_specs=pl.BlockSpec((_SUBLANE, _LANE), lambda p, s: (p, 0)),
            scratch_shapes=[pltpu.VMEM((_SUBLANE, _LANE), jnp.float32)],
        ),
        compiler_params=pltpu.CompilerParams(
            dimension_semantics=("parallel", "arbitrary"),
            vmem_limit_bytes=48 << 20),
        cost_estimate=pl.CostEstimate(
            flops=3 * rows * _LANE,
            transcendentals=0,
            bytes_accessed=bytes_in + parts * _SUBLANE * _LANE * 4),
    )(x2, y2)

    # Partial per-(sublane,lane) sums from each partition -> single reduce.
    return total + jnp.sum(out)


# ----------------------------- Loss wrappers ---------------------------------

class MSELossPallas:
    """Mirrors omnilearn Loss/MSELoss semantics ('mean', 'sum', 'batch-mean')."""

    def __init__(self, reduction="mean", div_batch=False):
        if reduction == "batch-mean":
            div_batch = True
            reduction = "sum"
        assert reduction in ("mean", "sum"), "only mean/sum/batch-mean supported"
        self.reduction = reduction
        self._div_batch = div_batch

    def __call__(self, pred, target):
        assert pred.shape == target.shape
        B = pred.shape[0]
        n_elem = pred.size
        total = _squared_error_sum(pred, target)
        if self.reduction == "mean":
            loss = total / jnp.float32(n_elem)
        else:
            loss = total
        if self._div_batch:
            loss = loss / jnp.float32(B)
        return loss


def get_loss_type(ident, **kwargs):
    if not isinstance(ident, str):
        return ident
    if ident == "mse":
        return MSELossPallas(**kwargs)
    # TODO(synk): other criteria (bce, bce-log, cross-entropy, nll, kl-div,
    # l1, huber, rmse, distrib-nll) not ported to Pallas.
    raise AssertionError("Unknown loss type: " + ident)


class VizCriterion:
    """JAX port of Viz_Criterion: pulls args from the `out` dict and applies the
    criterion; torch.no_grad() is emulated with jax.lax.stop_gradient."""

    def __init__(self, criterion, arg_names=(), kwarg_names=(), allow_grads=False):
        self.criterion = get_loss_type(criterion)
        self.arg_names = list(arg_names)
        self.kwarg_names = list(kwarg_names)
        self.allow_grads = allow_grads

    def __call__(self, out):
        args = [out[k] for k in self.arg_names]
        kwargs = {k: out[k] for k in self.kwarg_names}
        if not self.allow_grads:
            args = [jax.lax.stop_gradient(a) for a in args]
            kwargs = {k: jax.lax.stop_gradient(v) for k, v in kwargs.items()}
        return self.criterion(*args, **kwargs)


# ----------------------------------- main ------------------------------------

if __name__ == "__main__":
    key = jax.random.PRNGKey(0)
    k1, k2, k3, k4, k5, k6 = jax.random.split(key, 6)

    viz = VizCriterion(criterion="mse", arg_names=["pred", "target"],
                       allow_grads=False)

    # Small NCHW example (single-block fast path).
    B, C, H, W = 2, 4, 16, 16
    pred = jax.random.normal(k1, (B, C, H, W), dtype=jnp.float32)
    target = jax.random.normal(k2, (B, C, H, W), dtype=jnp.float32)

    loss = jax.block_until_ready(viz({"pred": pred, "target": target}))
    ref = jnp.mean((pred - target) ** 2)
    assert jnp.allclose(loss, ref, rtol=1e-5, atol=1e-6), (loss, ref)

    # Larger input exercising the tiled / ragged-last-row-block / (on v7x)
    # two-partition paths.
    pred2 = jax.random.normal(k3, (2, 9000, 8, 16), dtype=jnp.float32)
    targ2 = jax.random.normal(k4, (2, 9000, 8, 16), dtype=jnp.float32)
    loss2 = jax.block_until_ready(viz({"pred": pred2, "target": targ2}))
    ref2 = jnp.mean((pred2 - targ2) ** 2)
    assert jnp.allclose(loss2, ref2, rtol=1e-3, atol=1e-6), (loss2, ref2)

    # Odd shape exercising the lane-ragged tail path (kernel + tiny jnp tail).
    pred3 = jax.random.normal(k5, (2, 600, 3), dtype=jnp.float32)
    targ3 = jax.random.normal(k6, (2, 600, 3), dtype=jnp.float32)
    loss3 = jax.block_until_ready(viz({"pred": pred3, "target": targ3}))
    ref3 = jnp.mean((pred3 - targ3) ** 2)
    assert jnp.allclose(loss3, ref3, rtol=1e-4, atol=1e-6), (loss3, ref3)

    print("KERNEL_OK")
</pallas_src>

<mosaic_0001>
module attributes {stable_mosaic.version = 11 : i64} {
  func.func @_sq_err_kernel(%arg0: i32, %arg1: i32, %arg2: memref<16x128xf32, #tpu.memory_space<vmem>>, %arg3: memref<16x128xf32, #tpu.memory_space<vmem>>, %arg4: memref<8x128xf32, #tpu.memory_space<vmem>>, %arg5: memref<8x128xf32, #tpu.memory_space<vmem>>) attributes {dimension_semantics = [#tpu.dimension_semantics<parallel>, #tpu.dimension_semantics<arbitrary>], iteration_bounds = array<i64: 1, 1>, scalar_prefetch = 0 : i64, scratch_operands = 1 : i64, tpu.core_type = #tpu.core_type<tc>, window_params = [{transform_indices = @transform_0, window_bounds = array<i64: 16, 128>}, {transform_indices = @transform_1, window_bounds = array<i64: 16, 128>}, {transform_indices = @transform_2, window_bounds = array<i64: 8, 128>}]} {
    %c0_i32 = arith.constant 0 : i32
    %0 = arith.cmpi eq, %arg1, %c0_i32 : i32
    %1 = arith.extui %0 : i1 to i32
    %c0_i32_0 = arith.constant 0 : i32
    %2 = arith.cmpi ne, %1, %c0_i32_0 : i32
    scf.if %2 {
      %cst_10 = arith.constant 0.000000e+00 : f32
      %15 = vector.broadcast %cst_10 : f32 to vector<8x128xf32>
      %c0_11 = arith.constant 0 : index
      %c0_12 = arith.constant 0 : index
      %16 = vector.load %arg5[%c0_11, %c0_12] : memref<8x128xf32, #tpu.memory_space<vmem>>, vector<8x128xf32>
      tpu.vector_store %arg5[%c0_11, %c0_12], %15 {strides = array<i32>} : memref<8x128xf32, #tpu.memory_space<vmem>>, vector<8x128xf32>,
    } else {
    }
    %c0 = arith.constant 0 : index
    %c0_1 = arith.constant 0 : index
    %3 = vector.load %arg2[%c0, %c0_1] : memref<16x128xf32, #tpu.memory_space<vmem>>, vector<16x128xf32>
    %c0_2 = arith.constant 0 : index
    %c0_3 = arith.constant 0 : index
    %4 = vector.load %arg3[%c0_2, %c0_3] : memref<16x128xf32, #tpu.memory_space<vmem>>, vector<16x128xf32>
    %5 = arith.subf %3, %4 : vector<16x128xf32>
    %6 = arith.mulf %5, %5 : vector<16x128xf32>
    %c0_4 = arith.constant 0 : index
    %c0_5 = arith.constant 0 : index
    %7 = vector.load %arg5[%c0_4, %c0_5] : memref<8x128xf32, #tpu.memory_space<vmem>>, vector<8x128xf32>
    %8 = vector.shape_cast %6 : vector<16x128xf32> to vector<2x8x128xf32>
    %cst = arith.constant dense<0.000000e+00> : vector<8x128xf32>
    %9 = vector.multi_reduction <add>, %8, %cst [0] : vector<2x8x128xf32> to vector<8x128xf32>
    %10 = arith.addf %7, %9 : vector<8x128xf32>
    %c0_6 = arith.constant 0 : index
    %c0_7 = arith.constant 0 : index
    %11 = vector.load %arg5[%c0_6, %c0_7] : memref<8x128xf32, #tpu.memory_space<vmem>>, vector<8x128xf32>
    tpu.vector_store %arg5[%c0_6, %c0_7], %10 {strides = array<i32>} : memref<8x128xf32, #tpu.memory_space<vmem>>, vector<8x128xf32>,
    %c0_i32_8 = arith.constant 0 : i32
    %12 = arith.cmpi eq, %arg1, %c0_i32_8 : i32
    %13 = arith.extui %12 : i1 to i32
    %c0_i32_9 = arith.constant 0 : i32
    %14 = arith.cmpi ne, %13, %c0_i32_9 : i32
    scf.if %14 {
      %c0_10 = arith.constant 0 : index
      %c0_11 = arith.constant 0 : index
      %15 = vector.load %arg5[%c0_10, %c0_11] : memref<8x128xf32, #tpu.memory_space<vmem>>, vector<8x128xf32>
      %c0_12 = arith.constant 0 : index
      %c0_13 = arith.constant 0 : index
      %16 = vector.load %arg4[%c0_12, %c0_13] : memref<8x128xf32, #tpu.memory_space<vmem>>, vector<8x128xf32>
      tpu.vector_store %arg4[%c0_12, %c0_13], %15 {strides = array<i32>} : memref<8x128xf32, #tpu.memory_space<vmem>>, vector<8x128xf32>,
    } else {
    }
    return
  }
  func.func @transform_0(%arg0: i32, %arg1: i32) -> (i32, i32) {
    %c0_i32 = arith.constant 0 : i32
    %0 = arith.muli %arg0, %c0_i32 : i32
    %1 = arith.addi %0, %arg1 : i32
    %c0_i32_0 = arith.constant 0 : i32
    %c0_i32_1 = arith.constant 0 : i32
    return %1, %c0_i32_0 : i32, i32
  }
  func.func @transform_1(%arg0: i32, %arg1: i32) -> (i32, i32) {
    %c0_i32 = arith.constant 0 : i32
    %0 = arith.muli %arg0, %c0_i32 : i32
    %1 = arith.addi %0, %arg1 : i32
    %c0_i32_0 = arith.constant 0 : i32
    %c0_i32_1 = arith.constant 0 : i32
    return %1, %c0_i32_0 : i32, i32
  }
  func.func @transform_2(%arg0: i32, %arg1: i32) -> (i32, i32) {
    %c0_i32 = arith.constant 0 : i32
    %c0_i32_0 = arith.constant 0 : i32
    return %arg0, %c0_i32 : i32, i32
  }
}

</mosaic_0001>

<llo_original>
// kernel: tpu_custom_call.1
$region0: #{tpu_custom_call.1}
  #allocation0 [shape = 'u32[]', space=smem, size = 0x4, offset = 0x4, fixed_abs, tag = 'smem constant byte address 0x4 - core index']
  #allocation1 [shape = 'u32[144,128]{1,0:T(1,128)}', space=vmem, size = 0x12000, scoped, tag = 'internal scratch']
  #allocation2 [shape = 'f32[8,128]{1,0:T(8,128)}', space=vmem, size = 0x1000, scoped, tag = 'scratch operand']
  %s0 = inlined_call_operand.hbm [shape: f32[16,128], index: 0, kind: input, shape index: {}]
  %s1 = inlined_call_operand.hbm [shape: f32[16,128], index: 1, kind: input, shape index: {}]
  %s2 = inlined_call_operand.hbm [shape: f32[8,128], index: 2, kind: output, shape index: {}]
  %s3 = sld [smem:[#allocation0]]
  $region34: #{tpu_custom_call.1} parent=0
    _
  %s5 = ssub.s32 1, %s3
  %s6 = scalar_select 0, %s5, %s3
  $region1: #{tpu_custom_call.1} parent=0
    #allocation3 [shape = 'u8[8192]{0}', space=vmem, size = 0x2000, scoped, tag = 'input window, operand 0, single buffered']
    #allocation4 [shape = 's32[1]{0}', space=sflag, size = 0x4, scoped, tag = 'scoped memory for tpu_custom_call.1']
    #allocation5 [shape = 's32[1]{0}', space=sflag, size = 0x4, scoped, tag = 'scoped memory for tpu_custom_call.1']
    #allocation6 [shape = 'u8[8192]{0}', space=vmem, size = 0x2000, scoped, tag = 'input window, operand 1, single buffered']
    #allocation7 [shape = 's32[1]{0}', space=sflag, size = 0x4, scoped, tag = 'scoped memory for tpu_custom_call.1']
    #allocation8 [shape = 'u8[4096]{0}', space=vmem, size = 0x1000, scoped, tag = 'output window, operand 0, single buffered']
    %7 = vsyncpa [#allocation4], 0
    %8 = vsyncpa [#allocation7], 0
    %9 = vsyncpa [#allocation5], 0
    // Predicated region
    $region2: #{tpu_custom_call.1} parent=1 // pred_check
      _
    $region3: #{tpu_custom_call.1} parent=1 // pred_check_branch
      %11 = sbr.rel (0) target = $region5
    $region4: #{tpu_custom_call.1} parent=1 // pred_region
      %s13 = ssub.s32 256, 256
      %14 = vsyncadd [#allocation4], %s13
      %s15 = sshll.u32 [#allocation3], 4
      %s16 = int_to_ptr.vmem [resolvable:$true] %s15
      %21 = dma.hbm_to_vmem [thread:$0]  %s0, 256, %s16, [#allocation4], 128, 128, 8
    $region5: #{tpu_custom_call.1} parent=1 // pred_fallthru
      _
    // Predicated region
    $region6: #{tpu_custom_call.1} parent=1 // pred_check
      _
    $region7: #{tpu_custom_call.1} parent=1 // pred_check_branch
      %23 = sbr.rel (0) target = $region9
    $region8: #{tpu_custom_call.1} parent=1 // pred_region
      %s25 = ssub.s32 256, 256
      %26 = vsyncadd [#allocation7], %s25
      %s27 = sshll.u32 [#allocation6], 4
      %s28 = int_to_ptr.vmem [resolvable:$true] %s27
      %33 = dma.hbm_to_vmem [thread:$0]  %s1, 256, %s28, [#allocation7], 128, 128, 8
    $region9: #{tpu_custom_call.1} parent=1 // pred_fallthru
      _
    // Predicated region
    $region10: #{tpu_custom_call.1} parent=1 // pred_check
      _
    $region11: #{tpu_custom_call.1} parent=1 // pred_check_branch
      %35 = sbr.rel (0) target = $region13
    $region12: #{tpu_custom_call.1} parent=1 // pred_region
      %36 = dma.done [#allocation4], 256
    $region13: #{tpu_custom_call.1} parent=1 // pred_fallthru
      _
    // Predicated region
    $region14: #{tpu_custom_call.1} parent=1 // pred_check
      _
    $region15: #{tpu_custom_call.1} parent=1 // pred_check_branch
      %38 = sbr.rel (0) target = $region17
    $region16: #{tpu_custom_call.1} parent=1 // pred_region
      %39 = dma.done [#allocation7], 256
    $region17: #{tpu_custom_call.1} parent=1 // pred_fallthru
      _
    %p40 = scmp.eq.s32.totalorder 0, 0
    // Predicated region
    $region18: #{tpu_custom_call.1} parent=1 // pred_check
      %p41 = pneg %p40
    $region19: #{tpu_custom_call.1} parent=1 // pred_check_branch
      %43 = sbr.rel (%p41) target = $region21
    $region20: #{tpu_custom_call.1} parent=1 // pred_region
      %44 = vst [vmem:[#allocation2] sm:$0xff] 0.0
    $region21: #{tpu_custom_call.1} parent=1 // pred_fallthru
      _
    %v45 = vld [vmem:[#allocation3] sm:$0xff]
    %v46 = vld [vmem:[#allocation3 + $0x8] sm:$0xff]
    %v47 = vld [vmem:[#allocation6] sm:$0xff]
    %v48 = vld [vmem:[#allocation6 + $0x8] sm:$0xff]
    %v49 = vsub.f32 %v45, %v47
    %v50 = vsub.f32 %v46, %v48
    %v51 = vmul.f32 %v49, %v49
    %v52 = vmul.f32 %v50, %v50
    %v53 = vld [vmem:[#allocation2] sm:$0xff]
    %v54 = vadd.f32 %v51, %v52
    %v55 = vadd.f32 %v53, %v54
    %56 = vst [vmem:[#allocation2] sm:$0xff] %v55
    // Predicated region
    $region22: #{tpu_custom_call.1} parent=1 // pred_check
      %p57 = pneg %p40
    $region23: #{tpu_custom_call.1} parent=1 // pred_check_branch
      %59 = sbr.rel (%p57) target = $region25
    $region24: #{tpu_custom_call.1} parent=1 // pred_region
      %v60 = vld [vmem:[#allocation2] sm:$0xff]
      %61 = vst [vmem:[#allocation8] sm:$0xff] %v60
    $region25: #{tpu_custom_call.1} parent=1 // pred_fallthru
      _
    // Predicated region
    $region26: #{tpu_custom_call.1} parent=1 // pred_check
      _
    $region27: #{tpu_custom_call.1} parent=1 // pred_check_branch
      %63 = sbr.rel (0) target = $region29
    $region28: #{tpu_custom_call.1} parent=1 // pred_region
      %s65 = ssub.s32 128, 128
      %66 = vsyncadd [#allocation5], %s65
      %s68 = sshll.u32 [#allocation8], 4
      %s69 = int_to_ptr.vmem [resolvable:$true] %s68
      %71 = dma.vmem_to_hbm [thread:$0]  %s69, 128, %s2, [#allocation5]
    $region29: #{tpu_custom_call.1} parent=1 // pred_fallthru
      _
    // Predicated region
    $region30: #{tpu_custom_call.1} parent=1 // pred_check
      _
    $region31: #{tpu_custom_call.1} parent=1 // pred_check_branch
      %73 = sbr.rel (0) target = $region33
    $region32: #{tpu_custom_call.1} parent=1 // pred_region
      %74 = dma.done [#allocation5], 128
    $region33: #{tpu_custom_call.1} parent=1 // pred_fallthru
      _
    %75 = vsyncpa [#allocation4], 1
    %76 = vsyncpa [#allocation7], 1
    %77 = vsyncpa [#allocation5], 1

</llo_original>
